<compile_context>
chip_gen: v7x
topology: tpu7x:2x2x1
jax: 0.10.0
libtpu: 0.0.40
codegen_flags: <defaults>
</compile_context>

<pallas_src>
import jax
import jax.numpy as jnp
from jax.experimental import pallas as pl
from jax.experimental.pallas import tpu as pltpu


def _temp_scale_kernel(t_ref, x_ref, o_ref):
    # t_ref: (1,) scalar temperature in SMEM.
    # x_ref / o_ref: (TR, TC) tile of logits in VMEM.
    # Scalar reciprocal (scalar unit, once per grid step) + vector multiply keeps
    # the inner loop at one vld + vmul + vst per vreg, so the vector load/store
    # slots (the binding resource for this HBM-bound elementwise op) stay clear.
    inv_t = 1.0 / t_ref[0]
    o_ref[...] = (x_ref[...] * inv_t).astype(o_ref.dtype)


def _sublane_min(dtype) -> int:
    # Minimum sublane packing (second-to-last dim) per dtype width:
    # f32 -> 8, bf16/f16 -> 16, int8/fp8 -> 32.
    return {1: 32, 2: 16, 4: 8}.get(jnp.dtype(dtype).itemsize, 8)


def temperature_scale(logits: jax.Array, temperature: jax.Array,
                      *, target_block_bytes: int = 2 * 1024 * 1024) -> jax.Array:
    """Divide logits by a scalar temperature (Pallas TPU kernel).

    Blocks are auto-sized toward ~2 MiB so the kernel runs near the HBM roofline
    on v5e/v6e/v7x, while (in + out) x double-buffers (~8 MiB) stay far under
    v7x's 64 MiB per-core VMEM. Ragged shapes are padded in the wrapper.
    """
    B, C = logits.shape
    dtype = logits.dtype
    itemsize = jnp.dtype(dtype).itemsize
    sublane = _sublane_min(dtype)
    lane = 128

    # ---- column tile: full C for moderate widths, lane-multiple tile for huge C
    if C * itemsize <= target_block_bytes:
        tile_cols = C
    else:
        tile_cols = (target_block_bytes // itemsize // lane) * lane
        tile_cols = int(max(lane, min(tile_cols, 4096)))

    # ---- row tile: fill the block-byte budget, respect dtype sublane minimum
    rows_budget = target_block_bytes // (tile_cols * itemsize)
    rows_budget = max(sublane, (rows_budget // sublane) * sublane)
    rows_needed = pl.cdiv(B, sublane) * sublane          # B rounded up to sublane
    tile_rows = int(min(rows_budget, rows_needed))

    # ---- pad ragged edges so every block is full (no masked partial stores)
    Bp = pl.cdiv(B, tile_rows) * tile_rows
    Cp = pl.cdiv(C, tile_cols) * tile_cols
    x = logits
    if (Bp, Cp) != (B, C):
        x = jnp.pad(x, ((0, Bp - B), (0, Cp - C)))

    grid = (Bp // tile_rows, Cp // tile_cols)

    # VMEM budget: 2x double-buffered (in + out) blocks plus headroom,
    # capped at 64 MiB so the same sizing is safe on v7x.
    block_bytes = tile_rows * tile_cols * itemsize
    vmem_limit = int(min(64 * 1024 * 1024,
                         max(32 * 1024 * 1024, 4 * block_bytes + 4 * 1024 * 1024)))

    out = pl.pallas_call(
        _temp_scale_kernel,
        out_shape=jax.ShapeDtypeStruct((Bp, Cp), dtype),
        grid_spec=pl.GridSpec(
            grid=grid,
            in_specs=[
                # scalar temperature lives in SMEM, shared by every grid step
                pl.BlockSpec(memory_space=pltpu.SMEM),
                pl.BlockSpec((tile_rows, tile_cols), lambda i, j: (i, j)),
            ],
            out_specs=pl.BlockSpec((tile_rows, tile_cols), lambda i, j: (i, j)),
        ),
        compiler_params=pltpu.CompilerParams(
            dimension_semantics=("parallel", "parallel"),
            vmem_limit_bytes=vmem_limit,
        ),
    )(temperature, x)

    if (Bp, Cp) != (B, C):
        out = out[:B, :C]
    return out


if __name__ == "__main__":
    key = jax.random.PRNGKey(0)
    k1, k2 = jax.random.split(key)

    # nn.Parameter(torch.ones(1)) -> deterministic init to 1.0 (kept as shape (1,))
    temperature = jnp.ones((1,), dtype=jnp.float32)

    # primary check (small aligned shape)
    B, C = 8, 128
    logits = jax.random.normal(k1, (B, C), dtype=jnp.float32)
    out = temperature_scale(logits, temperature)
    jax.block_until_ready(out)
    ref = logits / temperature
    assert out.shape == logits.shape and out.dtype == logits.dtype
    assert jnp.allclose(out, ref, rtol=1e-6, atol=1e-6), "mismatch vs reference"

    # ragged shape + non-unit temperature exercises the padding / tiling path
    logits2 = jax.random.normal(k2, (10, 200), dtype=jnp.float32)
    temp2 = jnp.full((1,), 2.5, dtype=jnp.float32)
    out2 = temperature_scale(logits2, temp2)
    jax.block_until_ready(out2)
    ref2 = logits2 / temp2
    assert out2.shape == logits2.shape and out2.dtype == logits2.dtype
    assert jnp.allclose(out2, ref2, rtol=1e-6, atol=1e-6), "mismatch vs reference (ragged)"

    print("KERNEL_OK")
</pallas_src>

<mosaic_0001>
module attributes {stable_mosaic.version = 11 : i64} {
  func.func @_temp_scale_kernel(%arg0: i32, %arg1: i32, %arg2: memref<1xf32, #tpu.memory_space<smem>>, %arg3: memref<8x128xf32, #tpu.memory_space<vmem>>, %arg4: memref<8x128xf32, #tpu.memory_space<vmem>>) attributes {dimension_semantics = [#tpu.dimension_semantics<parallel>, #tpu.dimension_semantics<parallel>], iteration_bounds = array<i64: 1, 1>, scalar_prefetch = 0 : i64, scratch_operands = 0 : i64, tpu.core_type = #tpu.core_type<tc>, window_params = [{transform_indices = @transform_0, window_bounds = array<i64: 1>}, {transform_indices = @transform_1, window_bounds = array<i64: 8, 128>}, {transform_indices = @transform_2, window_bounds = array<i64: 8, 128>}]} {
    %c0 = arith.constant 0 : index
    %0 = memref.load %arg2[%c0] : memref<1xf32, #tpu.memory_space<smem>>
    %cst = arith.constant 1.000000e+00 : f32
    %1 = arith.divf %cst, %0 : f32
    %c0_0 = arith.constant 0 : index
    %c0_1 = arith.constant 0 : index
    %2 = vector.load %arg3[%c0_0, %c0_1] : memref<8x128xf32, #tpu.memory_space<vmem>>, vector<8x128xf32>
    %3 = vector.broadcast %1 : f32 to vector<8x128xf32>
    %4 = arith.mulf %2, %3 : vector<8x128xf32>
    %c0_2 = arith.constant 0 : index
    %c0_3 = arith.constant 0 : index
    %5 = vector.load %arg4[%c0_2, %c0_3] : memref<8x128xf32, #tpu.memory_space<vmem>>, vector<8x128xf32>
    tpu.vector_store %arg4[%c0_2, %c0_3], %4 {strides = array<i32>} : memref<8x128xf32, #tpu.memory_space<vmem>>, vector<8x128xf32>,
    return
  }
  func.func @transform_0(%arg0: i32, %arg1: i32) -> i32 {
    %c0_i32 = arith.constant 0 : i32
    %c0_i32_0 = arith.constant 0 : i32
    return %c0_i32 : i32
  }
  func.func @transform_1(%arg0: i32, %arg1: i32) -> (i32, i32) {
    %c0_i32 = arith.constant 0 : i32
    return %arg0, %arg1 : i32, i32
  }
  func.func @transform_2(%arg0: i32, %arg1: i32) -> (i32, i32) {
    %c0_i32 = arith.constant 0 : i32
    return %arg0, %arg1 : i32, i32
  }
}

</mosaic_0001>

<llo_original>
// kernel: tpu_custom_call.1
$region0: #{tpu_custom_call.1}
  #allocation0 [shape = 'u32[]', space=smem, size = 0x4, offset = 0x4, fixed_abs, tag = 'smem constant byte address 0x4 - core index']
  #allocation1 [shape = 'u32[144,128]{1,0:T(1,128)}', space=vmem, size = 0x12000, scoped, tag = 'internal scratch']
  #allocation2 [shape = 'f32[1]{0:T(128)S(6)}', space=smem, size = 0x200, scoped, tag = 'scoped memory for tpu_custom_call.1']
  %s0 = inlined_call_operand.<no memory space> [shape: f32[1], index: 0, kind: input, shape index: {}]
  %s1 = inlined_call_operand.hbm [shape: f32[8,128], index: 1, kind: input, shape index: {}]
  %s2 = inlined_call_operand.hbm [shape: f32[8,128], index: 2, kind: output, shape index: {}]
  %s3 = sld [smem:[#allocation0]]
  $region22: #{tpu_custom_call.1} parent=0
    _
  %s5 = ssub.s32 1, %s3
  %s6 = scalar_select 0, %s5, %s3
  %7 = sst [smem:[#allocation2]] %s0
  $region1: #{tpu_custom_call.1} parent=0
    #allocation3 [shape = 'u8[4096]{0}', space=vmem, size = 0x1000, scoped, tag = 'input window, operand 1, single buffered']
    #allocation4 [shape = 's32[1]{0}', space=sflag, size = 0x4, scoped, tag = 'scoped memory for tpu_custom_call.1']
    #allocation5 [shape = 's32[1]{0}', space=sflag, size = 0x4, scoped, tag = 'scoped memory for tpu_custom_call.1']
    #allocation6 [shape = 'u8[4096]{0}', space=vmem, size = 0x1000, scoped, tag = 'output window, operand 0, single buffered']
    %8 = vsyncpa [#allocation4], 0
    %9 = vsyncpa [#allocation5], 0
    // Predicated region
    $region2: #{tpu_custom_call.1} parent=1 // pred_check
      _
    $region3: #{tpu_custom_call.1} parent=1 // pred_check_branch
      %11 = sbr.rel (0) target = $region5
    $region4: #{tpu_custom_call.1} parent=1 // pred_region
      _
    $region5: #{tpu_custom_call.1} parent=1 // pred_fallthru
      _
    // Predicated region
    $region6: #{tpu_custom_call.1} parent=1 // pred_check
      _
    $region7: #{tpu_custom_call.1} parent=1 // pred_check_branch
      %13 = sbr.rel (0) target = $region9
    $region8: #{tpu_custom_call.1} parent=1 // pred_region
      %s15 = ssub.s32 128, 128
      %16 = vsyncadd [#allocation4], %s15
      %s18 = sshll.u32 [#allocation3], 4
      %s19 = int_to_ptr.vmem [resolvable:$true] %s18
      %21 = dma.hbm_to_vmem [thread:$0]  %s1, 128, %s19, [#allocation4]
    $region9: #{tpu_custom_call.1} parent=1 // pred_fallthru
      _
    // Predicated region
    $region10: #{tpu_custom_call.1} parent=1 // pred_check
      _
    $region11: #{tpu_custom_call.1} parent=1 // pred_check_branch
      %23 = sbr.rel (0) target = $region13
    $region12: #{tpu_custom_call.1} parent=1 // pred_region
      %24 = dma.done [#allocation4], 128
    $region13: #{tpu_custom_call.1} parent=1 // pred_fallthru
      _
    %s25 = sld [smem:[#allocation2]]
    %v26 = vstv %s25
    %v27 = vrcp.pop %v26
    %s28 = vtos %v27
    %v29 = vld [vmem:[#allocation3] sm:$0xff]
    %v30 = vstv %s28
    %v31 = vmul.f32 %v29, %v30
    %32 = vst [vmem:[#allocation6] sm:$0xff] %v31
    // Predicated region
    $region14: #{tpu_custom_call.1} parent=1 // pred_check
      _
    $region15: #{tpu_custom_call.1} parent=1 // pred_check_branch
      %34 = sbr.rel (0) target = $region17
    $region16: #{tpu_custom_call.1} parent=1 // pred_region
      %s36 = ssub.s32 128, 128
      %37 = vsyncadd [#allocation5], %s36
      %s39 = sshll.u32 [#allocation6], 4
      %s40 = int_to_ptr.vmem [resolvable:$true] %s39
      %42 = dma.vmem_to_hbm [thread:$0]  %s40, 128, %s2, [#allocation5]
    $region17: #{tpu_custom_call.1} parent=1 // pred_fallthru
      _
    // Predicated region
    $region18: #{tpu_custom_call.1} parent=1 // pred_check
      _
    $region19: #{tpu_custom_call.1} parent=1 // pred_check_branch
      %44 = sbr.rel (0) target = $region21
    $region20: #{tpu_custom_call.1} parent=1 // pred_region
      %45 = dma.done [#allocation5], 128
    $region21: #{tpu_custom_call.1} parent=1 // pred_fallthru
      _
    %46 = vsyncpa [#allocation4], 1
    %47 = vsyncpa [#allocation5], 1

</llo_original>
